<compile_context>
chip_gen: v7x
topology: tpu7x:2x2x1
jax: 0.10.0
libtpu: 0.0.40
codegen_flags: <defaults>
</compile_context>

<pallas_src>
import functools

import jax
import jax.numpy as jnp
from jax.experimental import pallas as pl
from jax.experimental.pallas import tpu as pltpu

GAMMA = 1.0
LMBDA = 0.975
EPSILON = 0.2
BETA = 0.04


def _round_up(x, m):
    return ((x + m - 1) // m) * m


def _loss_kernel(n, new_lp_ref, act_ref, ref_lp_ref, adv_ref,
                 surr_ref, dkl_ref, gathered_scr):
    # n:            static number of valid rows (Python int, closed over)
    # new_lp_ref:   (TN, TA)     input dtype (f32 / bf16) in VMEM
    # act_ref:      (TN, 1)      i32 in VMEM   (resident across the A axis)
    # ref_lp_ref:   (TN, 1)      f32 in VMEM
    # adv_ref:      (TN, 1)      f32 in VMEM
    # surr_ref:     (1, 1, 128)  f32 out: per-row-tile partial sum of surrogate
    # dkl_ref:      (1, 1, 128)  f32 out: per-row-tile partial sum of 0.5*(r-1)^2
    # gathered_scr: (TN, 1)      f32 VMEM scratch (accumulates gathered log-prob)
    i = pl.program_id(0)
    j = pl.program_id(1)
    tn, ta = new_lp_ref.shape

    @pl.when(j == 0)
    def _():
        gathered_scr[...] = jnp.zeros_like(gathered_scr)

    tile = new_lp_ref[...]                                       # (TN, TA)
    # Local lane iota vs. tile-local action index (scalar-side j*TA offset).
    col = jax.lax.broadcasted_iota(jnp.int32, (tn, ta), 1)
    local_act = act_ref[...] - j * ta                            # (TN, 1)
    zero = jnp.zeros((), dtype=tile.dtype)
    # Masked-select gather: at most one lane per valid row is non-zero, so the
    # lane-sum is exact even in bf16; stale lanes of a partial A block can
    # never match a valid in-range action.  Upcast only the (TN, 1) result.
    part = jnp.sum(jnp.where(col == local_act, tile, zero),
                   axis=-1, keepdims=True).astype(jnp.float32)
    gathered_scr[...] += part

    @pl.when(j == pl.num_programs(1) - 1)
    def _():
        ref_lp = ref_lp_ref[...]
        adv = adv_ref[...]
        ratio = jnp.exp(gathered_scr[...] - ref_lp)              # (TN, 1)
        lb = jnp.where(adv < 0.0, 1.0 - EPSILON, 0.0)
        ub = jnp.where(adv > 0.0, 1.0 + EPSILON, 10000.0)
        clipped = jnp.clip(ratio, lb, ub)
        surr = jnp.minimum(ratio * adv, clipped * adv)           # (TN, 1)
        dkl = 0.5 * jnp.square(ratio - 1.0)                      # (TN, 1)
        # Mask stale rows of the partial edge row tile before reducing.
        row = jax.lax.broadcasted_iota(jnp.int32, (tn, 1), 0) + i * tn
        valid = row < n
        surr = jnp.where(valid, surr, 0.0)
        dkl = jnp.where(valid, dkl, 0.0)
        surr_ref[...] = jnp.full(surr_ref.shape, jnp.sum(surr), dtype=jnp.float32)
        dkl_ref[...] = jnp.full(dkl_ref.shape, jnp.sum(dkl), dtype=jnp.float32)


@jax.jit
def _loss_pallas(new_log_probs, actions, ref_log_probs, advantages):
    n, a = new_log_probs.shape
    itemsize = jnp.dtype(new_log_probs.dtype).itemsize

    # Row tile: 256 rows when N is large; if N <= 256 try to still produce two
    # row tiles (so the "parallel" axis feeds both v7x TensorCores); tiny N
    # uses a single full-extent tile (block dim == array dim, always legal).
    if n > 256:
        tn = 256
    elif n >= 64:
        tn = _round_up((n + 1) // 2, 16)
    else:
        tn = n
    grid_n = pl.cdiv(n, tn)

    # Action tile: lane-dense, ~4 MiB per input buffer (2x double-buffered =
    # 8 MiB, safe on v5e/v6e/v7x with the explicit 32 MiB VMEM limit below).
    target_bytes = 4 * 1024 * 1024
    ta_cap = max(128, ((target_bytes // (tn * itemsize)) // 128) * 128)
    ta = a if a <= ta_cap else ta_cap
    grid_a = pl.cdiv(a, ta)

    acts_col = actions.astype(jnp.int32).reshape(n, 1)
    ref_col = ref_log_probs.astype(jnp.float32).reshape(n, 1)
    adv_col = advantages.astype(jnp.float32).reshape(n, 1)

    kernel = functools.partial(_loss_kernel, n)

    surr_parts, dkl_parts = pl.pallas_call(
        kernel,
        out_shape=(jax.ShapeDtypeStruct((grid_n, 1, 128), jnp.float32),
                   jax.ShapeDtypeStruct((grid_n, 1, 128), jnp.float32)),
        grid_spec=pltpu.PrefetchScalarGridSpec(
            num_scalar_prefetch=0,
            grid=(grid_n, grid_a),
            in_specs=[
                pl.BlockSpec((tn, ta), lambda i, j: (i, j)),
                pl.BlockSpec((tn, 1), lambda i, j: (i, 0)),
                pl.BlockSpec((tn, 1), lambda i, j: (i, 0)),
                pl.BlockSpec((tn, 1), lambda i, j: (i, 0)),
            ],
            out_specs=[
                pl.BlockSpec((1, 1, 128), lambda i, j: (i, 0, 0)),
                pl.BlockSpec((1, 1, 128), lambda i, j: (i, 0, 0)),
            ],
            scratch_shapes=[pltpu.VMEM((tn, 1), jnp.float32)],
        ),
        compiler_params=pltpu.CompilerParams(
            dimension_semantics=("parallel", "arbitrary"),
            vmem_limit_bytes=32 * 1024 * 1024),
        cost_estimate=pl.CostEstimate(
            flops=3 * n * a + 16 * n,
            transcendentals=n,
            bytes_accessed=n * a * itemsize + 4 * n * 4
                           + 2 * grid_n * 128 * 4),
    )(new_log_probs, acts_col, ref_col, adv_col)

    # Tiny final reduction over per-row-tile partial sums.
    surr_sum = jnp.sum(surr_parts[:, 0, 0])
    dkl_sum = jnp.sum(dkl_parts[:, 0, 0])
    actor = -(surr_sum / n)
    dkl = dkl_sum / n
    loss = actor + BETA * dkl
    return loss, actor, dkl


def loss_forward(pack, new_log_probs):
    """Mirrors Loss.forward: returns dict with loss / actor / dkl / steps.

    actor/dkl are returned as JAX scalars (no host sync) instead of .item().
    """
    n = pack["ref_log_probs"].shape[0]
    loss, actor, dkl = _loss_pallas(
        new_log_probs, pack["actions"], pack["ref_log_probs"], pack["advantages"]
    )
    return {"loss": loss, "actor": actor, "dkl": dkl, "steps": n}


def _reference(pack, new_log_probs):
    n = pack["ref_log_probs"].shape[0]
    gathered = new_log_probs[jnp.arange(n), pack["actions"]]
    ratio = jnp.exp(gathered.astype(jnp.float32) - pack["ref_log_probs"])
    adv = pack["advantages"]
    lb = jnp.where(adv < 0, 1.0 - EPSILON, 0.0)
    ub = jnp.where(adv > 0, 1.0 + EPSILON, 10000.0)
    actor = -jnp.mean(jnp.minimum(ratio * adv, jnp.clip(ratio, lb, ub) * adv))
    dkl = jnp.mean(jnp.square(ratio - 1.0)) / 2.0
    return actor + BETA * dkl, actor, dkl


if __name__ == "__main__":
    key = jax.random.PRNGKey(0)
    k1, k2, k3, k4 = jax.random.split(key, 4)

    N, A = 8, 32  # steps, action-space size
    new_log_probs = jax.nn.log_softmax(
        jax.random.normal(k1, (N, A), dtype=jnp.float32), axis=-1
    )
    actions = jax.random.randint(k2, (N,), 0, A, dtype=jnp.int32)
    ref_log_probs = jax.nn.log_softmax(
        jax.random.normal(k3, (N, A), dtype=jnp.float32), axis=-1
    )[jnp.arange(N), actions]
    advantages = jax.random.normal(k4, (N,), dtype=jnp.float32)

    pack = {
        "ref_log_probs": ref_log_probs,
        "actions": actions,
        "advantages": advantages,
    }

    result = loss_forward(pack, new_log_probs)
    jax.block_until_ready(result["loss"])

    # sanity check against a pure-JAX reference
    ref_loss, ref_actor, ref_dkl = _reference(pack, new_log_probs)
    assert jnp.allclose(result["loss"], ref_loss, atol=1e-5), (result, ref_loss)
    assert jnp.allclose(result["actor"], ref_actor, atol=1e-5)
    assert jnp.allclose(result["dkl"], ref_dkl, atol=1e-5)
    assert result["steps"] == N

    print("KERNEL_OK")
</pallas_src>

<mosaic_0001>
module attributes {stable_mosaic.version = 11 : i64} {
  func.func @_loss_kernel(%arg0: i32, %arg1: i32, %arg2: memref<8x32xf32, #tpu.memory_space<vmem>>, %arg3: memref<8x1xi32, #tpu.memory_space<vmem>>, %arg4: memref<8x1xf32, #tpu.memory_space<vmem>>, %arg5: memref<8x1xf32, #tpu.memory_space<vmem>>, %arg6: memref<1x1x128xf32, #tpu.memory_space<vmem>>, %arg7: memref<1x1x128xf32, #tpu.memory_space<vmem>>, %arg8: memref<8x1xf32, #tpu.memory_space<vmem>>) attributes {dimension_semantics = [#tpu.dimension_semantics<parallel>, #tpu.dimension_semantics<arbitrary>], iteration_bounds = array<i64: 1, 1>, scalar_prefetch = 0 : i64, scratch_operands = 1 : i64, tpu.core_type = #tpu.core_type<tc>, window_params = [{transform_indices = @transform_0, window_bounds = array<i64: 8, 32>}, {transform_indices = @transform_1, window_bounds = array<i64: 8, 1>}, {transform_indices = @transform_2, window_bounds = array<i64: 8, 1>}, {transform_indices = @transform_3, window_bounds = array<i64: 8, 1>}, {transform_indices = @transform_4, window_bounds = array<i64: 1, 1, 128>}, {transform_indices = @transform_5, window_bounds = array<i64: 1, 1, 128>}]} {
    %c0_i32 = arith.constant 0 : i32
    %0 = arith.cmpi eq, %arg1, %c0_i32 : i32
    %1 = arith.extui %0 : i1 to i32
    %c0_i32_0 = arith.constant 0 : i32
    %2 = arith.cmpi ne, %1, %c0_i32_0 : i32
    scf.if %2 {
      %cst_11 = arith.constant 0.000000e+00 : f32
      %21 = vector.broadcast %cst_11 : f32 to vector<8x1xf32>
      %c0_12 = arith.constant 0 : index
      %c0_13 = arith.constant 0 : index
      %22 = vector.load %arg8[%c0_12, %c0_13] : memref<8x1xf32, #tpu.memory_space<vmem>>, vector<8x1xf32>
      tpu.vector_store %arg8[%c0_12, %c0_13], %21 {strides = array<i32>} : memref<8x1xf32, #tpu.memory_space<vmem>>, vector<8x1xf32>,
    } else {
    }
    %c0 = arith.constant 0 : index
    %c0_1 = arith.constant 0 : index
    %3 = vector.load %arg2[%c0, %c0_1] : memref<8x32xf32, #tpu.memory_space<vmem>>, vector<8x32xf32>
    %4 = tpu.iota {dimensions = array<i32: 1>} : vector<8x32xi32>
    %c0_2 = arith.constant 0 : index
    %c0_3 = arith.constant 0 : index
    %5 = vector.load %arg3[%c0_2, %c0_3] : memref<8x1xi32, #tpu.memory_space<vmem>>, vector<8x1xi32>
    %c32_i32 = arith.constant 32 : i32
    %6 = arith.muli %arg1, %c32_i32 : i32
    %7 = vector.broadcast %6 : i32 to vector<8x1xi32>
    %8 = arith.subi %5, %7 : vector<8x1xi32>
    %9 = vector.broadcast %8 : vector<8x1xi32> to vector<8x32xi32>
    %10 = arith.cmpi eq, %4, %9 : vector<8x32xi32>
    %cst = arith.constant 0.000000e+00 : f32
    %11 = vector.broadcast %cst : f32 to vector<8x32xf32>
    %12 = arith.select %10, %3, %11 : vector<8x32xi1>, vector<8x32xf32>
    %cst_4 = arith.constant dense<0.000000e+00> : vector<8xf32>
    %13 = vector.multi_reduction <add>, %12, %cst_4 [1] : vector<8x32xf32> to vector<8xf32>
    %14 = vector.shape_cast %13 : vector<8xf32> to vector<8x1xf32>
    %c0_5 = arith.constant 0 : index
    %c0_6 = arith.constant 0 : index
    %15 = vector.load %arg8[%c0_5, %c0_6] : memref<8x1xf32, #tpu.memory_space<vmem>>, vector<8x1xf32>
    %16 = arith.addf %15, %14 : vector<8x1xf32>
    %c0_7 = arith.constant 0 : index
    %c0_8 = arith.constant 0 : index
    %17 = vector.load %arg8[%c0_7, %c0_8] : memref<8x1xf32, #tpu.memory_space<vmem>>, vector<8x1xf32>
    tpu.vector_store %arg8[%c0_7, %c0_8], %16 {strides = array<i32>} : memref<8x1xf32, #tpu.memory_space<vmem>>, vector<8x1xf32>,
    %c0_i32_9 = arith.constant 0 : i32
    %18 = arith.cmpi eq, %arg1, %c0_i32_9 : i32
    %19 = arith.extui %18 : i1 to i32
    %c0_i32_10 = arith.constant 0 : i32
    %20 = arith.cmpi ne, %19, %c0_i32_10 : i32
    scf.if %20 {
      %c0_11 = arith.constant 0 : index
      %c0_12 = arith.constant 0 : index
      %21 = vector.load %arg4[%c0_11, %c0_12] : memref<8x1xf32, #tpu.memory_space<vmem>>, vector<8x1xf32>
      %c0_13 = arith.constant 0 : index
      %c0_14 = arith.constant 0 : index
      %22 = vector.load %arg5[%c0_13, %c0_14] : memref<8x1xf32, #tpu.memory_space<vmem>>, vector<8x1xf32>
      %c0_15 = arith.constant 0 : index
      %c0_16 = arith.constant 0 : index
      %23 = vector.load %arg8[%c0_15, %c0_16] : memref<8x1xf32, #tpu.memory_space<vmem>>, vector<8x1xf32>
      %24 = arith.subf %23, %21 : vector<8x1xf32>
      %25 = math.exp %24 : vector<8x1xf32>
      %cst_17 = arith.constant 0.000000e+00 : f32
      %26 = vector.broadcast %cst_17 : f32 to vector<8x1xf32>
      %27 = arith.cmpf olt, %22, %26 : vector<8x1xf32>
      %cst_18 = arith.constant 8.000000e-01 : f32
      %cst_19 = arith.constant 0.000000e+00 : f32
      %28 = vector.broadcast %cst_18 : f32 to vector<8x1xf32>
      %29 = vector.broadcast %cst_19 : f32 to vector<8x1xf32>
      %30 = arith.select %27, %28, %29 : vector<8x1xi1>, vector<8x1xf32>
      %cst_20 = arith.constant 0.000000e+00 : f32
      %31 = vector.broadcast %cst_20 : f32 to vector<8x1xf32>
      %32 = arith.cmpf ogt, %22, %31 : vector<8x1xf32>
      %cst_21 = arith.constant 1.200000e+00 : f32
      %cst_22 = arith.constant 1.000000e+04 : f32
      %33 = vector.broadcast %cst_21 : f32 to vector<8x1xf32>
      %34 = vector.broadcast %cst_22 : f32 to vector<8x1xf32>
      %35 = arith.select %32, %33, %34 : vector<8x1xi1>, vector<8x1xf32>
      %36 = arith.maximumf %30, %25 : vector<8x1xf32>
      %37 = arith.minimumf %35, %36 : vector<8x1xf32>
      %38 = arith.mulf %25, %22 : vector<8x1xf32>
      %39 = arith.mulf %37, %22 : vector<8x1xf32>
      %40 = arith.minimumf %38, %39 : vector<8x1xf32>
      %cst_23 = arith.constant 1.000000e+00 : f32
      %41 = vector.broadcast %cst_23 : f32 to vector<8x1xf32>
      %42 = arith.subf %25, %41 : vector<8x1xf32>
      %43 = arith.mulf %42, %42 : vector<8x1xf32>
      %cst_24 = arith.constant 5.000000e-01 : f32
      %44 = vector.broadcast %cst_24 : f32 to vector<8x1xf32>
      %45 = arith.mulf %44, %43 : vector<8x1xf32>
      %46 = tpu.iota {dimensions = array<i32: 0>} : vector<8x1xi32>
      %c8_i32 = arith.constant 8 : i32
      %47 = arith.muli %arg0, %c8_i32 : i32
      %48 = vector.broadcast %47 : i32 to vector<8x1xi32>
      %49 = arith.addi %46, %48 : vector<8x1xi32>
      %c8_i32_25 = arith.constant 8 : i32
      %50 = vector.broadcast %c8_i32_25 : i32 to vector<8x1xi32>
      %51 = arith.cmpi slt, %49, %50 : vector<8x1xi32>
      %cst_26 = arith.constant 0.000000e+00 : f32
      %52 = vector.broadcast %cst_26 : f32 to vector<8x1xf32>
      %53 = arith.select %51, %40, %52 : vector<8x1xi1>, vector<8x1xf32>
      %cst_27 = arith.constant 0.000000e+00 : f32
      %54 = vector.broadcast %cst_27 : f32 to vector<8x1xf32>
      %55 = arith.select %51, %45, %54 : vector<8x1xi1>, vector<8x1xf32>
      %56 = vector.shape_cast %53 : vector<8x1xf32> to vector<1x8x1xf32>
      %cst_28 = arith.constant dense<0.000000e+00> : vector<1xf32>
      %57 = vector.multi_reduction <add>, %56, %cst_28 [1, 2] : vector<1x8x1xf32> to vector<1xf32>
      %58 = vector.shape_cast %57 : vector<1xf32> to vector<1x1x1xf32>
      %59 = vector.extract %58[0, 0, 0] : f32 from vector<1x1x1xf32>
      %60 = vector.broadcast %59 : f32 to vector<1x1x128xf32>
      %c0_29 = arith.constant 0 : index
      %c0_30 = arith.constant 0 : index
      %c0_31 = arith.constant 0 : index
      %61 = vector.load %arg6[%c0_29, %c0_30, %c0_31] : memref<1x1x128xf32, #tpu.memory_space<vmem>>, vector<1x1x128xf32>
      tpu.vector_store %arg6[%c0_29, %c0_30, %c0_31], %60 {strides = array<i32>} : memref<1x1x128xf32, #tpu.memory_space<vmem>>, vector<1x1x128xf32>,
      %62 = vector.shape_cast %55 : vector<8x1xf32> to vector<1x8x1xf32>
      %cst_32 = arith.constant dense<0.000000e+00> : vector<1xf32>
      %63 = vector.multi_reduction <add>, %62, %cst_32 [1, 2] : vector<1x8x1xf32> to vector<1xf32>
      %64 = vector.shape_cast %63 : vector<1xf32> to vector<1x1x1xf32>
      %65 = vector.extract %64[0, 0, 0] : f32 from vector<1x1x1xf32>
      %66 = vector.broadcast %65 : f32 to vector<1x1x128xf32>
      %c0_33 = arith.constant 0 : index
      %c0_34 = arith.constant 0 : index
      %c0_35 = arith.constant 0 : index
      %67 = vector.load %arg7[%c0_33, %c0_34, %c0_35] : memref<1x1x128xf32, #tpu.memory_space<vmem>>, vector<1x1x128xf32>
      tpu.vector_store %arg7[%c0_33, %c0_34, %c0_35], %66 {strides = array<i32>} : memref<1x1x128xf32, #tpu.memory_space<vmem>>, vector<1x1x128xf32>,
    } else {
    }
    return
  }
  func.func @transform_0(%arg0: i32, %arg1: i32) -> (i32, i32) {
    %c0_i32 = arith.constant 0 : i32
    return %arg0, %arg1 : i32, i32
  }
  func.func @transform_1(%arg0: i32, %arg1: i32) -> (i32, i32) {
    %c0_i32 = arith.constant 0 : i32
    %c0_i32_0 = arith.constant 0 : i32
    return %arg0, %c0_i32 : i32, i32
  }
  func.func @transform_2(%arg0: i32, %arg1: i32) -> (i32, i32) {
    %c0_i32 = arith.constant 0 : i32
    %c0_i32_0 = arith.constant 0 : i32
    return %arg0, %c0_i32 : i32, i32
  }
  func.func @transform_3(%arg0: i32, %arg1: i32) -> (i32, i32) {
    %c0_i32 = arith.constant 0 : i32
    %c0_i32_0 = arith.constant 0 : i32
    return %arg0, %c0_i32 : i32, i32
  }
  func.func @transform_4(%arg0: i32, %arg1: i32) -> (i32, i32, i32) {
    %c0_i32 = arith.constant 0 : i32
    %c0_i32_0 = arith.constant 0 : i32
    %c0_i32_1 = arith.constant 0 : i32
    return %arg0, %c0_i32, %c0_i32_0 : i32, i32, i32
  }
  func.func @transform_5(%arg0: i32, %arg1: i32) -> (i32, i32, i32) {
    %c0_i32 = arith.constant 0 : i32
    %c0_i32_0 = arith.constant 0 : i32
    %c0_i32_1 = arith.constant 0 : i32
    return %arg0, %c0_i32, %c0_i32_0 : i32, i32, i32
  }
}

</mosaic_0001>

<llo_original>
// kernel: _loss_pallas.1
$region0: #{_loss_pallas.1}
  #allocation0 [shape = 'u32[]', space=smem, size = 0x4, offset = 0x4, fixed_abs, tag = 'smem constant byte address 0x4 - core index']
  #allocation1 [shape = 'u32[144,128]{1,0:T(1,128)}', space=vmem, size = 0x12000, scoped, tag = 'internal scratch']
  #allocation2 [shape = 'f32[8,1]{1,0:T(8,128)}', space=vmem, size = 0x1000, scoped, tag = 'scratch operand']
  %s0 = inlined_call_operand.vmem [shape: f32[8,32], index: 0, kind: input, shape index: {}]
  %s1 = inlined_call_operand.vmem [shape: s32[8,1], index: 1, kind: input, shape index: {}]
  %s2 = inlined_call_operand.vmem [shape: f32[8,1], index: 2, kind: input, shape index: {}]
  %s3 = inlined_call_operand.vmem [shape: f32[8,1], index: 3, kind: input, shape index: {}]
  %s4 = inlined_call_operand.vmem [shape: f32[1,1,128], index: 4, kind: output, shape index: {0}]
  %s5 = inlined_call_operand.vmem [shape: f32[1,1,128], index: 5, kind: output, shape index: {1}]
  %6 = xla_tuple %s4, %s5
  %s7 = sld [smem:[#allocation0]]
  $region42: #{_loss_pallas.1} parent=0
    _
  %s9 = ssub.s32 1, %s7
  %s10 = scalar_select 0, %s9, %s7
  // Predicated region
  $region2: #{_loss_pallas.1} parent=0 // pred_check
    _
  $region3: #{_loss_pallas.1} parent=0 // pred_check_branch
    %12 = sbr.rel (0) target = $region5
  $region4: #{_loss_pallas.1} parent=0 // pred_region
    _
  $region5: #{_loss_pallas.1} parent=0 // pred_fallthru
    _
  // Predicated region
  $region6: #{_loss_pallas.1} parent=0 // pred_check
    _
  $region7: #{_loss_pallas.1} parent=0 // pred_check_branch
    %14 = sbr.rel (0) target = $region9
  $region8: #{_loss_pallas.1} parent=0 // pred_region
    _
  $region9: #{_loss_pallas.1} parent=0 // pred_fallthru
    _
  // Predicated region
  $region10: #{_loss_pallas.1} parent=0 // pred_check
    _
  $region11: #{_loss_pallas.1} parent=0 // pred_check_branch
    %16 = sbr.rel (0) target = $region13
  $region12: #{_loss_pallas.1} parent=0 // pred_region
    _
  $region13: #{_loss_pallas.1} parent=0 // pred_fallthru
    _
  // Predicated region
  $region14: #{_loss_pallas.1} parent=0 // pred_check
    _
  $region15: #{_loss_pallas.1} parent=0 // pred_check_branch
    %18 = sbr.rel (0) target = $region17
  $region16: #{_loss_pallas.1} parent=0 // pred_region
    _
  $region17: #{_loss_pallas.1} parent=0 // pred_fallthru
    _
  %p19 = scmp.eq.s32.totalorder 0, 0
  // Predicated region
  $region18: #{_loss_pallas.1} parent=0 // pred_check
    %p20 = pneg %p19
  $region19: #{_loss_pallas.1} parent=0 // pred_check_branch
    %22 = sbr.rel (%p20) target = $region21
  $region20: #{_loss_pallas.1} parent=0 // pred_region
    %vm23 = vcmask 7168
    %24 = vst.msk [vmem:[#allocation2] sm:$0xff] %vm23, 0.0
  $region21: #{_loss_pallas.1} parent=0 // pred_fallthru
    _
  %v25 = vld [vmem:[%s0] sm:$0xff]
  %v26 = vlaneseq
  %v27 = vand.u32 %v26, 127
  %v28 = vld [vmem:[%s1] sm:$0xff]
  %s29 = smul.u32 0, 32
  %v30 = vstv %s29
  %v31 = vsub.s32 %v28, %v30
  %32 = vset.pattern.permute.xlu0 0
  %33 = vperm.xlu0 %32, %v31
  %v34 = vpop.permute.xlu0 %33
  %vm35 = vcmp.eq.s32.totalorder %v27, %v34
  %v36 = vsel %vm35, %v25, 0.0
  %vm37 = vcmask 261120
  %v38 = vsel %vm37, %v36, 0.0
  %39 = vadd.xlane.f32.xlu0 %v38
  %v40 = vpop.xlane.xlu0 %39
  %v41 = vld [vmem:[#allocation2] sm:$0xff]
  %v42 = vadd.f32 %v41, %v40
  %vm43 = vcmask 7168
  %44 = vst.msk [vmem:[#allocation2] sm:$0xff] %vm43, %v42
  // Predicated region
  $region22: #{_loss_pallas.1} parent=0 // pred_check
    %p45 = pneg %p19
  $region23: #{_loss_pallas.1} parent=0 // pred_check_branch
    %47 = sbr.rel (%p45) target = $region25
  $region24: #{_loss_pallas.1} parent=0 // pred_region
    %v48 = vld [vmem:[%s2] sm:$0xff]
    %v49 = vld [vmem:[%s3] sm:$0xff]
    %v50 = vld [vmem:[#allocation2] sm:$0xff]
    %v51 = vsub.f32 %v50, %v48
    %v52 = vmul.f32 %v51, 1.442695
    %v53 = vpow.pop %v52
    %vm54 = vcmp.lt.f32.partialorder %v49, 0.0
    %v55 = vsel %vm54, 0.8, 0.0
    %vm56 = vcmp.gt.f32.partialorder %v49, 0.0
    %v57 = vsel %vm56, 1.2, 10000.0
    %v58 = vmax.f32 %v55, %v53
    %v59 = vmin.f32 %v57, %v58
    %v60 = vmul.f32 %v53, %v49
    %v61 = vmul.f32 %v59, %v49
    %v62 = vmin.f32 %v60, %v61
    %v63 = vsub.f32 %v53, 1.0
    %v64 = vmul.f32 %v63, %v63
    %v65 = vmul.f32 %v64, 0.5
    %v66 = vlaneseq
    %v67 = vshrl.u32 %v66, 7
    %s68 = smul.u32 0, 8
    %v69 = vstv %s68
    %v70 = vadd.s32 %v67, %v69
    %vm71 = vcmp.lt.s32.totalorder %v70, 8
    %v72 = vsel %vm71, %v62, 0.0
    %v73 = vsel %vm71, %v65, 0.0
    %v74 = vsel %vm43, %v72, 0.0
    %75 = vadd.xlane.f32.xlu0 %v74
    %v76 = vpop.xlane.xlu0 %75
    %v77 = vrot.slane %v76, 4
    %v78 = vadd.f32 %v76, %v77
    %v79 = vrot.slane %v78, 2
    %v80 = vadd.f32 %v78, %v79
    %v81 = vrot.slane %v80, 1
    %v82 = vadd.f32 %v80, %v81
    %s83 = vtos %v82
    %v84 = vstv %s83
    %85 = vst [vmem:[%s4] sm:$0x1] %v84
    %v86 = vsel %vm43, %v73, 0.0
    %87 = vadd.xlane.f32.xlu0 %v86
    %v88 = vpop.xlane.xlu0 %87
    %v89 = vrot.slane %v88, 4
    %v90 = vadd.f32 %v88, %v89
    %v91 = vrot.slane %v90, 2
    %v92 = vadd.f32 %v90, %v91
    %v93 = vrot.slane %v92, 1
    %v94 = vadd.f32 %v92, %v93
    %s95 = vtos %v94
    %v96 = vstv %s95
    %97 = vst [vmem:[%s5] sm:$0x1] %v96
  $region25: #{_loss_pallas.1} parent=0 // pred_fallthru
    _
  // Predicated region
  $region26: #{_loss_pallas.1} parent=0 // pred_check
    _
  $region27: #{_loss_pallas.1} parent=0 // pred_check_branch
    %99 = sbr.rel (0) target = $region29
  $region28: #{_loss_pallas.1} parent=0 // pred_region
    _
  $region29: #{_loss_pallas.1} parent=0 // pred_fallthru
    _
  // Predicated region
  $region30: #{_loss_pallas.1} parent=0 // pred_check
    _
  $region31: #{_loss_pallas.1} parent=0 // pred_check_branch
    %101 = sbr.rel (0) target = $region33
  $region32: #{_loss_pallas.1} parent=0 // pred_region
    _
  $region33: #{_loss_pallas.1} parent=0 // pred_fallthru
    _
  // Predicated region
  $region34: #{_loss_pallas.1} parent=0 // pred_check
    _
  $region35: #{_loss_pallas.1} parent=0 // pred_check_branch
    %103 = sbr.rel (0) target = $region37
  $region36: #{_loss_pallas.1} parent=0 // pred_region
    _
  $region37: #{_loss_pallas.1} parent=0 // pred_fallthru
    _
  // Predicated region
  $region38: #{_loss_pallas.1} parent=0 // pred_check
    _
  $region39: #{_loss_pallas.1} parent=0 // pred_check_branch
    %105 = sbr.rel (0) target = $region41
  $region40: #{_loss_pallas.1} parent=0 // pred_region
    _
  $region41: #{_loss_pallas.1} parent=0 // pred_fallthru
    _

</llo_original>
